<compile_context>
chip_gen: v7x
topology: tpu7x:2x2x1
jax: 0.10.0
libtpu: 0.0.40
codegen_flags: <defaults>
</compile_context>

<pallas_src>
import jax
import jax.numpy as jnp
from jax.experimental import pallas as pl
from jax.experimental.pallas import tpu as pltpu


def _qlinear_kernel(x_ref, w_ref, scale_ref, bias_ref, o_ref, acc_ref):
    # x_ref:     (tm, tk) f32      activation tile
    # w_ref:     (tk, tn) int8     pre-transposed weight tile (int8 over DMA)
    # scale_ref: (1,  tn) f32      per-output-channel scale
    # bias_ref:  (1,  tn) f32
    # o_ref:     (tm, tn) f32
    # acc_ref:   (tm, tn) f32      VMEM accumulator scratch
    k = pl.program_id(2)

    @pl.when(k == 0)
    def _():
        acc_ref[...] = jnp.zeros_like(acc_ref)

    x = x_ref[...].astype(jnp.bfloat16)        # bf16 MXU operand
    w = w_ref[...].astype(jnp.bfloat16)        # int8 -> bf16 is exact (unscaled)
    acc_ref[...] += jnp.dot(x, w, preferred_element_type=jnp.float32)

    @pl.when(k == pl.num_programs(2) - 1)
    def _():
        # Post-matmul dequant epilogue in f32: scale factors out of the K-sum.
        o_ref[...] = (acc_ref[...] * scale_ref[...] + bias_ref[...]).astype(o_ref.dtype)


def _round_up(a, b):
    return -(-a // b) * b


def _pick_k_tile(k_dim, preferred, align=128):
    """Largest tile <= preferred that is a multiple of `align` AND divides
    k_dim exactly (reduction tiles must not overhang); falls back to full K."""
    t = min(preferred, k_dim)
    t = (t // align) * align
    while t >= align:
        if k_dim % t == 0:
            return t
        t -= align
    return k_dim


def dynamic_quantize_linear(x, weight, weight_scale, bias=None, *,
                            tile_m=256, tile_n=256, tile_k=1024):
    """x: [..., in_features] float; weight: [out, in] int8; scale/bias: [out]."""
    out_features, in_features = weight.shape
    assert x.shape[-1] == in_features
    lead_shape = x.shape[:-1]

    x2d = x.reshape(-1, in_features).astype(jnp.float32)
    M, K, N = x2d.shape[0], in_features, out_features

    # One-time relayout: (N, K) int8 -> (K, N) int8 so the MXU consumes it
    # directly; stays int8 through HBM->VMEM DMA (4x fewer bytes than f32).
    w_t = weight.T

    scale2d = weight_scale.reshape(1, N).astype(jnp.float32)
    bias2d = (jnp.zeros((1, N), jnp.float32) if bias is None
              else bias.reshape(1, N).astype(jnp.float32))

    # Tile selection (sublane/lane aligned; fall back to full extents).
    tm = min(tile_m, _round_up(M, 8))                  # rows: multiple of 8
    tn = min(tile_n, N) if N % 128 == 0 else N         # lanes: 128-mult or full N
    tk = _pick_k_tile(K, tile_k)                       # must divide K exactly

    grid = (pl.cdiv(M, tm), pl.cdiv(N, tn), K // tk)

    cost = pl.CostEstimate(
        flops=2 * M * K * N,
        transcendentals=0,
        bytes_accessed=(M * K * 4) + (K * N) + (N * 4) + (N * 4) + (M * N * 4),
    )

    out = pl.pallas_call(
        _qlinear_kernel,
        out_shape=jax.ShapeDtypeStruct((M, N), jnp.float32),
        grid_spec=pltpu.PrefetchScalarGridSpec(
            num_scalar_prefetch=0,
            grid=grid,
            in_specs=[
                pl.BlockSpec((tm, tk), lambda i, j, k: (i, k)),   # x
                pl.BlockSpec((tk, tn), lambda i, j, k: (k, j)),   # weight (K, N) int8
                pl.BlockSpec((1, tn), lambda i, j, k: (0, j)),    # scale
                pl.BlockSpec((1, tn), lambda i, j, k: (0, j)),    # bias
            ],
            out_specs=pl.BlockSpec((tm, tn), lambda i, j, k: (i, j)),
            scratch_shapes=[pltpu.VMEM((tm, tn), jnp.float32)],
        ),
        compiler_params=pltpu.CompilerParams(
            dimension_semantics=("parallel", "parallel", "arbitrary")),
        cost_estimate=cost,
    )(x2d, w_t, scale2d, bias2d)

    return out.reshape(*lead_shape, N).astype(x.dtype)


if __name__ == "__main__":
    # Small, module-consistent shapes: batch=2, seq=8, in_features=32, out_features=128.
    in_features = 32
    out_features = 128
    key = jax.random.PRNGKey(0)
    k_x, k_w, k_s, k_b = jax.random.split(key, 4)

    x = jax.random.normal(k_x, (2, 8, in_features), dtype=jnp.float32)
    weight = jax.random.randint(
        k_w, (out_features, in_features), -127, 128, dtype=jnp.int32
    ).astype(jnp.int8)
    weight_scale = (
        jax.random.uniform(k_s, (out_features,), dtype=jnp.float32) * 0.05 + 0.005
    )
    bias = jax.random.normal(k_b, (out_features,), dtype=jnp.float32)

    out = dynamic_quantize_linear(x, weight, weight_scale, bias)
    out = jax.block_until_ready(out)
    assert out.shape == (2, 8, out_features)

    # The kernel feeds the MXU bf16 operands (int8 -> bf16 exact; x rounded to
    # bf16) with f32 accumulation, then applies scale/bias in f32 after the
    # contraction (mathematically identical ordering to the module).
    # (1) tight check against a reference with the same bf16-rounded x,
    # (2) loose sanity check against the pure-f32 reference (tolerance sized
    #     to bf16 operand rounding).
    x_bf = x.astype(jnp.bfloat16).astype(jnp.float32)
    ref_bf16 = (x_bf @ weight.astype(jnp.float32).T) * weight_scale + bias
    ref_f32 = x @ (weight.astype(jnp.float32).T * weight_scale) + bias

    assert jnp.allclose(out, ref_bf16, atol=1e-3, rtol=1e-3), float(
        jnp.max(jnp.abs(out - ref_bf16)))
    assert jnp.allclose(out, ref_f32, atol=3e-1, rtol=5e-2), float(
        jnp.max(jnp.abs(out - ref_f32)))

    print("KERNEL_OK")
</pallas_src>

<mosaic_0001>
module attributes {stable_mosaic.version = 11 : i64} {
  func.func @_qlinear_kernel(%arg0: i32, %arg1: i32, %arg2: i32, %arg3: memref<16x32xf32, #tpu.memory_space<vmem>>, %arg4: memref<32x128xi8, #tpu.memory_space<vmem>>, %arg5: memref<1x128xf32, #tpu.memory_space<vmem>>, %arg6: memref<1x128xf32, #tpu.memory_space<vmem>>, %arg7: memref<16x128xf32, #tpu.memory_space<vmem>>, %arg8: memref<16x128xf32, #tpu.memory_space<vmem>>) attributes {dimension_semantics = [#tpu.dimension_semantics<parallel>, #tpu.dimension_semantics<parallel>, #tpu.dimension_semantics<arbitrary>], iteration_bounds = array<i64: 1, 1, 1>, scalar_prefetch = 0 : i64, scratch_operands = 1 : i64, tpu.core_type = #tpu.core_type<tc>, window_params = [{transform_indices = @transform_0, window_bounds = array<i64: 16, 32>}, {transform_indices = @transform_1, window_bounds = array<i64: 32, 128>}, {transform_indices = @transform_2, window_bounds = array<i64: 1, 128>}, {transform_indices = @transform_3, window_bounds = array<i64: 1, 128>}, {transform_indices = @transform_4, window_bounds = array<i64: 16, 128>}]} {
    %c0_i32 = arith.constant 0 : i32
    %0 = arith.cmpi eq, %arg2, %c0_i32 : i32
    %1 = arith.extui %0 : i1 to i32
    %c0_i32_0 = arith.constant 0 : i32
    %2 = arith.cmpi ne, %1, %c0_i32_0 : i32
    scf.if %2 {
      %cst_10 = arith.constant 0.000000e+00 : f32
      %14 = vector.broadcast %cst_10 : f32 to vector<16x128xf32>
      %c0_11 = arith.constant 0 : index
      %c0_12 = arith.constant 0 : index
      %15 = vector.load %arg8[%c0_11, %c0_12] : memref<16x128xf32, #tpu.memory_space<vmem>>, vector<16x128xf32>
      tpu.vector_store %arg8[%c0_11, %c0_12], %14 {strides = array<i32>} : memref<16x128xf32, #tpu.memory_space<vmem>>, vector<16x128xf32>,
    } else {
    }
    %c0 = arith.constant 0 : index
    %c0_1 = arith.constant 0 : index
    %3 = vector.load %arg3[%c0, %c0_1] : memref<16x32xf32, #tpu.memory_space<vmem>>, vector<16x32xf32>
    %4 = arith.truncf %3 : vector<16x32xf32> to vector<16x32xbf16>
    %c0_2 = arith.constant 0 : index
    %c0_3 = arith.constant 0 : index
    %5 = vector.load %arg4[%c0_2, %c0_3] : memref<32x128xi8, #tpu.memory_space<vmem>>, vector<32x128xi8>
    %6 = arith.sitofp %5 : vector<32x128xi8> to vector<32x128xbf16>
    %c0_4 = arith.constant 0 : index
    %c0_5 = arith.constant 0 : index
    %7 = vector.load %arg8[%c0_4, %c0_5] : memref<16x128xf32, #tpu.memory_space<vmem>>, vector<16x128xf32>
    %cst = arith.constant dense<0.000000e+00> : vector<16x128xf32>
    %8 = tpu.matmul %4, %6, %cst {dimension_numbers = #tpu.dot_dimension_numbers<[1], [0], [0], [1], [0, 0, 1, 1], [], []>} : vector<16x32xbf16>, vector<32x128xbf16>, vector<16x128xf32> -> vector<16x128xf32>
    %9 = arith.addf %7, %8 : vector<16x128xf32>
    %c0_6 = arith.constant 0 : index
    %c0_7 = arith.constant 0 : index
    %10 = vector.load %arg8[%c0_6, %c0_7] : memref<16x128xf32, #tpu.memory_space<vmem>>, vector<16x128xf32>
    tpu.vector_store %arg8[%c0_6, %c0_7], %9 {strides = array<i32>} : memref<16x128xf32, #tpu.memory_space<vmem>>, vector<16x128xf32>,
    %c0_i32_8 = arith.constant 0 : i32
    %11 = arith.cmpi eq, %arg2, %c0_i32_8 : i32
    %12 = arith.extui %11 : i1 to i32
    %c0_i32_9 = arith.constant 0 : i32
    %13 = arith.cmpi ne, %12, %c0_i32_9 : i32
    scf.if %13 {
      %c0_10 = arith.constant 0 : index
      %c0_11 = arith.constant 0 : index
      %14 = vector.load %arg8[%c0_10, %c0_11] : memref<16x128xf32, #tpu.memory_space<vmem>>, vector<16x128xf32>
      %c0_12 = arith.constant 0 : index
      %c0_13 = arith.constant 0 : index
      %15 = vector.load %arg5[%c0_12, %c0_13] : memref<1x128xf32, #tpu.memory_space<vmem>>, vector<1x128xf32>
      %16 = vector.broadcast %15 : vector<1x128xf32> to vector<16x128xf32>
      %17 = arith.mulf %14, %16 : vector<16x128xf32>
      %c0_14 = arith.constant 0 : index
      %c0_15 = arith.constant 0 : index
      %18 = vector.load %arg6[%c0_14, %c0_15] : memref<1x128xf32, #tpu.memory_space<vmem>>, vector<1x128xf32>
      %19 = vector.broadcast %18 : vector<1x128xf32> to vector<16x128xf32>
      %20 = arith.addf %17, %19 : vector<16x128xf32>
      %c0_16 = arith.constant 0 : index
      %c0_17 = arith.constant 0 : index
      %21 = vector.load %arg7[%c0_16, %c0_17] : memref<16x128xf32, #tpu.memory_space<vmem>>, vector<16x128xf32>
      tpu.vector_store %arg7[%c0_16, %c0_17], %20 {strides = array<i32>} : memref<16x128xf32, #tpu.memory_space<vmem>>, vector<16x128xf32>,
    } else {
    }
    return
  }
  func.func @transform_0(%arg0: i32, %arg1: i32, %arg2: i32) -> (i32, i32) {
    %c0_i32 = arith.constant 0 : i32
    return %arg0, %arg2 : i32, i32
  }
  func.func @transform_1(%arg0: i32, %arg1: i32, %arg2: i32) -> (i32, i32) {
    %c0_i32 = arith.constant 0 : i32
    return %arg2, %arg1 : i32, i32
  }
  func.func @transform_2(%arg0: i32, %arg1: i32, %arg2: i32) -> (i32, i32) {
    %c0_i32 = arith.constant 0 : i32
    %c0_i32_0 = arith.constant 0 : i32
    return %c0_i32, %arg1 : i32, i32
  }
  func.func @transform_3(%arg0: i32, %arg1: i32, %arg2: i32) -> (i32, i32) {
    %c0_i32 = arith.constant 0 : i32
    %c0_i32_0 = arith.constant 0 : i32
    return %c0_i32, %arg1 : i32, i32
  }
  func.func @transform_4(%arg0: i32, %arg1: i32, %arg2: i32) -> (i32, i32) {
    %c0_i32 = arith.constant 0 : i32
    return %arg0, %arg1 : i32, i32
  }
}

</mosaic_0001>

<llo_original>
// kernel: tpu_custom_call.1
$region0: #{tpu_custom_call.1}
  #allocation0 [shape = 'u32[]', space=smem, size = 0x4, offset = 0x4, fixed_abs, tag = 'smem constant byte address 0x4 - core index']
  #allocation1 [shape = 'u32[144,128]{1,0:T(1,128)}', space=vmem, size = 0x12000, scoped, tag = 'internal scratch']
  #allocation2 [shape = 'f32[16,128]{1,0:T(8,128)}', space=vmem, size = 0x2000, scoped, tag = 'scratch operand']
  %s0 = inlined_call_operand.hbm [shape: f32[16,32], index: 0, kind: input, shape index: {}]
  %s1 = inlined_call_operand.hbm [shape: s8[32,128], index: 1, kind: input, shape index: {}]
  %s2 = inlined_call_operand.vmem [shape: f32[1,128], index: 2, kind: input, shape index: {}]
  %s3 = inlined_call_operand.vmem [shape: f32[1,128], index: 3, kind: input, shape index: {}]
  %s4 = inlined_call_operand.hbm [shape: f32[16,128], index: 4, kind: output, shape index: {}]
  %s5 = sld [smem:[#allocation0]]
  $region42: #{tpu_custom_call.1} parent=0
    _
  %s7 = ssub.s32 1, %s5
  %s8 = scalar_select 0, %s7, %s5
  $region1: #{tpu_custom_call.1} parent=0
    #allocation3 [shape = 'u8[8192]{0}', space=vmem, size = 0x2000, scoped, tag = 'input window, operand 0, single buffered']
    #allocation4 [shape = 's32[1]{0}', space=sflag, size = 0x4, scoped, tag = 'scoped memory for tpu_custom_call.1']
    #allocation5 [shape = 's32[1]{0}', space=sflag, size = 0x4, scoped, tag = 'scoped memory for tpu_custom_call.1']
    #allocation6 [shape = 'u8[4096]{0}', space=vmem, size = 0x1000, scoped, tag = 'input window, operand 1, single buffered']
    #allocation7 [shape = 's32[1]{0}', space=sflag, size = 0x4, scoped, tag = 'scoped memory for tpu_custom_call.1']
    #allocation8 [shape = 'u8[8192]{0}', space=vmem, size = 0x2000, scoped, tag = 'output window, operand 0, single buffered']
    %9 = vsyncpa [#allocation4], 0
    %10 = vsyncpa [#allocation7], 0
    %11 = vsyncpa [#allocation5], 0
    // Predicated region
    $region2: #{tpu_custom_call.1} parent=1 // pred_check
      _
    $region3: #{tpu_custom_call.1} parent=1 // pred_check_branch
      %13 = sbr.rel (0) target = $region5
    $region4: #{tpu_custom_call.1} parent=1 // pred_region
      %s15 = ssub.s32 256, 256
      %16 = vsyncadd [#allocation4], %s15
      %s17 = sshll.u32 [#allocation3], 4
      %s18 = int_to_ptr.vmem [resolvable:$true] %s17
      %23 = dma.hbm_to_vmem [thread:$0]  %s0, 256, %s18, [#allocation4], 128, 128, 8
    $region5: #{tpu_custom_call.1} parent=1 // pred_fallthru
      _
    // Predicated region
    $region6: #{tpu_custom_call.1} parent=1 // pred_check
      _
    $region7: #{tpu_custom_call.1} parent=1 // pred_check_branch
      %25 = sbr.rel (0) target = $region9
    $region8: #{tpu_custom_call.1} parent=1 // pred_region
      %s27 = ssub.s32 128, 128
      %28 = vsyncadd [#allocation7], %s27
      %s30 = sshll.u32 [#allocation6], 4
      %s31 = int_to_ptr.vmem [resolvable:$true] %s30
      %33 = dma.hbm_to_vmem [thread:$0]  %s1, 128, %s31, [#allocation7]
    $region9: #{tpu_custom_call.1} parent=1 // pred_fallthru
      _
    // Predicated region
    $region10: #{tpu_custom_call.1} parent=1 // pred_check
      _
    $region11: #{tpu_custom_call.1} parent=1 // pred_check_branch
      %35 = sbr.rel (0) target = $region13
    $region12: #{tpu_custom_call.1} parent=1 // pred_region
      _
    $region13: #{tpu_custom_call.1} parent=1 // pred_fallthru
      _
    // Predicated region
    $region14: #{tpu_custom_call.1} parent=1 // pred_check
      _
    $region15: #{tpu_custom_call.1} parent=1 // pred_check_branch
      %37 = sbr.rel (0) target = $region17
    $region16: #{tpu_custom_call.1} parent=1 // pred_region
      _
    $region17: #{tpu_custom_call.1} parent=1 // pred_fallthru
      _
    // Predicated region
    $region18: #{tpu_custom_call.1} parent=1 // pred_check
      _
    $region19: #{tpu_custom_call.1} parent=1 // pred_check_branch
      %39 = sbr.rel (0) target = $region21
    $region20: #{tpu_custom_call.1} parent=1 // pred_region
      %40 = dma.done [#allocation4], 256
    $region21: #{tpu_custom_call.1} parent=1 // pred_fallthru
      _
    // Predicated region
    $region22: #{tpu_custom_call.1} parent=1 // pred_check
      _
    $region23: #{tpu_custom_call.1} parent=1 // pred_check_branch
      %42 = sbr.rel (0) target = $region25
    $region24: #{tpu_custom_call.1} parent=1 // pred_region
      %43 = dma.done [#allocation7], 128
    $region25: #{tpu_custom_call.1} parent=1 // pred_fallthru
      _
    %p45 = scmp.eq.s32.totalorder 0, 0
    // Predicated region
    $region26: #{tpu_custom_call.1} parent=1 // pred_check
      %p46 = pneg %p45
    $region27: #{tpu_custom_call.1} parent=1 // pred_check_branch
      %48 = sbr.rel (%p46) target = $region29
    $region28: #{tpu_custom_call.1} parent=1 // pred_region
      %49 = vst [vmem:[#allocation2] sm:$0xff] 0.0
      %50 = vst [vmem:[#allocation2 + $0x8] sm:$0xff] 0.0
    $region29: #{tpu_custom_call.1} parent=1 // pred_fallthru
      _
    %v51 = vld [vmem:[#allocation3] sm:$0xff]
    %v52 = vld [vmem:[#allocation3 + $0x8] sm:$0xff]
    %v53 = vpack.c.bf16 %v52, %v51
    %v54 = vld [vmem:[#allocation6] sm:$0xff]
    %v55 = vunpack.c.l.s8.bf16 %v54
    %v56 = vunpack.c.h.s8.bf16 %v54
    %v57 = vld [vmem:[#allocation2] sm:$0xff]
    %v58 = vld [vmem:[#allocation2 + $0x8] sm:$0xff]
    %vm59 = vcmask 261120
    %v61 = vsel %vm59, %v53, 0
    %63 = vmatprep.subr.bf16.mxu0 0
    %64 = vmatpush1.bf16.msra.mxu0 %v55
    %65 = vmatprep.subr.bf16.mxu0 0
    %66 = vmatpush1.bf16.msra.mxu0 %v56
    %67 = vmatprep.subr.bf16.mxu0 0
    %68 = vmatpush1.bf16.msra.mxu0 0
    %69 = vmatprep.subr.bf16.mxu0 0
    %70 = vmatpush1.bf16.msra.mxu0 0
    %71 = vmatprep.subr.bf16.mxu0 0
    %72 = vmatpush1.bf16.msra.mxu0 0
    %73 = vmatprep.subr.bf16.mxu0 0
    %74 = vmatpush1.bf16.msra.mxu0 0
    %75 = vmatprep.subr.bf16.mxu0 0
    %76 = vmatpush1.bf16.msra.mxu0 0
    %77 = vmatprep.subr.bf16.mxu0 0
    %78 = vmatpush1.bf16.msra.mxu0 0
    %79 = vmatprep.subr.bf16.mxu0 0
    %80 = vmatpush1.bf16.msra.mxu0 0
    %81 = vmatprep.subr.bf16.mxu0 0
    %82 = vmatpush1.bf16.msra.mxu0 0
    %83 = vmatprep.subr.bf16.mxu0 0
    %84 = vmatpush1.bf16.msra.mxu0 0
    %85 = vmatprep.subr.bf16.mxu0 0
    %86 = vmatpush1.bf16.msra.mxu0 0
    %87 = vmatprep.subr.bf16.mxu0 0
    %88 = vmatpush1.bf16.msra.mxu0 0
    %89 = vmatprep.subr.bf16.mxu0 0
    %90 = vmatpush1.bf16.msra.mxu0 0
    %91 = vmatprep.subr.bf16.mxu0 0
    %92 = vmatpush1.bf16.msra.mxu0 0
    %93 = vmatprep.subr.bf16.mxu0 0
    %94 = vmatpush1.bf16.msra.mxu0 0
    %95 = vmatprep.mubr.bf16.mxu0 0
    %96 = vmatmul.mubr.bf16.gmra.mrb[0].mxu0 %v61
    %v97 = vpop.f32.mrb[0].mxu0
    %v98 = vadd.f32 0.0, %v97
    %v99 = vpop.f32.mrb[0].mxu0
    %v100 = vpop.f32.mrb[0].mxu0
    %v101 = vadd.f32 0.0, %v100
    %v102 = vpop.f32.mrb[0].mxu0
    %103 = vdwg.mxu0
    %v104 = vadd.f32 %v57, %v98
    %v105 = vadd.f32 %v58, %v101
    %106 = vst [vmem:[#allocation2] sm:$0xff] %v104
    %107 = vst [vmem:[#allocation2 + $0x8] sm:$0xff] %v105
    // Predicated region
    $region30: #{tpu_custom_call.1} parent=1 // pred_check
      %p108 = pneg %p45
    $region31: #{tpu_custom_call.1} parent=1 // pred_check_branch
      %110 = sbr.rel (%p108) target = $region33
    $region32: #{tpu_custom_call.1} parent=1 // pred_region
      %v111 = vld [vmem:[#allocation2] sm:$0xff]
      %v112 = vld [vmem:[#allocation2 + $0x8] sm:$0xff]
      %v113 = vld [vmem:[%s2] sm:$0x1]
      %v115 = vlaneseq
      %v116 = vshrl.u32 %v115, 7
      %v117 = vsub.s32 0, %v116
      %v118 = vrot.slane %v113, %v117
      %v120 = vmul.f32 %v111, %v118
      %v121 = vmul.f32 %v112, %v118
      %v122 = vld [vmem:[%s3] sm:$0x1]
      %v124 = vlaneseq
      %v125 = vshrl.u32 %v124, 7
      %v126 = vsub.s32 0, %v125
      %v127 = vrot.slane %v122, %v126
      %v129 = vadd.f32 %v120, %v127
      %v130 = vadd.f32 %v121, %v127
      %131 = vst [vmem:[#allocation8] sm:$0xff] %v129
      %132 = vst [vmem:[#allocation8 + $0x8] sm:$0xff] %v130
    $region33: #{tpu_custom_call.1} parent=1 // pred_fallthru
      _
    // Predicated region
    $region34: #{tpu_custom_call.1} parent=1 // pred_check
      _
    $region35: #{tpu_custom_call.1} parent=1 // pred_check_branch
      %134 = sbr.rel (0) target = $region37
    $region36: #{tpu_custom_call.1} parent=1 // pred_region
      %s136 = ssub.s32 256, 256
      %137 = vsyncadd [#allocation5], %s136
      %s138 = sshll.u32 [#allocation8], 4
      %s139 = int_to_ptr.vmem [resolvable:$true] %s138
      %144 = dma.vmem_to_hbm [thread:$0]  %s139, 256, %s4, [#allocation5], 128, 128, 8
    $region37: #{tpu_custom_call.1} parent=1 // pred_fallthru
      _
    // Predicated region
    $region38: #{tpu_custom_call.1} parent=1 // pred_check
      _
    $region39: #{tpu_custom_call.1} parent=1 // pred_check_branch
      %146 = sbr.rel (0) target = $region41
    $region40: #{tpu_custom_call.1} parent=1 // pred_region
      %147 = dma.done [#allocation5], 256
    $region41: #{tpu_custom_call.1} parent=1 // pred_fallthru
      _
    %148 = vsyncpa [#allocation4], 1
    %149 = vsyncpa [#allocation7], 1
    %150 = vsyncpa [#allocation5], 1

</llo_original>
